<compile_context>
chip_gen: v7x
topology: tpu7x:2x2x1
jax: 0.10.0
libtpu: 0.0.40
codegen_flags: <defaults>
</compile_context>

<pallas_src>
import jax
import jax.numpy as jnp
from jax.experimental import pallas as pl
from jax.experimental.pallas import tpu as pltpu


# ----------------------------------------------------------------------------
# Kernel
# ----------------------------------------------------------------------------
def _make_rope_kernel(half, chunk, packed):
    """half = D//2, chunk = per-position dim D, packed = (row width W > D)."""

    def rope_kernel(x_ref, cos_ref, sin_ref, o_ref):
        x = x_ref[...]                                  # (Bblk, TL, W)
        lane_axis = x.ndim - 1
        W = x.shape[lane_axis]
        if not packed:
            # W == D: rotate_half is a single lane rotation (direction-free
            # since D == 2*half); sign folded into the sin table.
            x_rot = pltpu.roll(x, shift=half, axis=lane_axis)
        else:
            # W == k*D: rotate_half acts within each D-wide chunk.  Build it
            # from two full-width rolls (XLU slot) + one lane select (VPU).
            fwd = pltpu.roll(x, shift=(W - half) % W, axis=lane_axis)  # x[p+half] at p
            bwd = pltpu.roll(x, shift=half, axis=lane_axis)            # x[p-half] at p
            lane = jax.lax.broadcasted_iota(jnp.int32, x.shape, lane_axis)
            x_rot = jnp.where((lane % chunk) < half, fwd, bwd)
        cos = cos_ref[...][None]                        # (1, TL, W)
        sin = sin_ref[...][None]                        # (1, TL, W), sign-folded
        o_ref[...] = (x * cos + x_rot * sin).astype(o_ref.dtype)

    return rope_kernel


# ----------------------------------------------------------------------------
# Tiling: VMEM-budgeted, batch-blocked
# ----------------------------------------------------------------------------
def _choose_tiles(B, Lp, W, x_itemsize, tab_itemsize,
                  target_block_bytes=2 * 1024 * 1024,
                  vmem_budget_bytes=10 * 1024 * 1024):
    """Pick (batch_block, seq_block) so each grid step moves ~target_block_bytes
    of x while the 2-deep double-buffered footprint (x + out + cos + sin) stays
    well under every generation's default scoped-VMEM limit."""
    row_bytes = W * x_itemsize

    def footprint(bblk, tl):
        x_and_out = bblk * tl * W * x_itemsize * 2
        tables = tl * W * tab_itemsize * 2
        return 2 * (x_and_out + tables)          # double buffering

    max_tl_rows = max(8, target_block_bytes // max(row_bytes, 1))
    if Lp <= max_tl_rows:
        tl = Lp                                   # block == full dim -> always legal
    else:
        tl = max(8, min((max_tl_rows // 8) * 8, (Lp // 8) * 8))  # multiple of 8

    bblk = max(1, min(B, target_block_bytes // max(tl * row_bytes, 1)))
    while footprint(bblk, tl) > vmem_budget_bytes and bblk > 1:
        bblk = max(1, bblk // 2)
    while footprint(bblk, tl) > vmem_budget_bytes and tl > 8:
        tl = max(8, ((tl // 2) // 8) * 8)
    return bblk, tl


# ----------------------------------------------------------------------------
# Table construction (mirrors the module's cos_cached / sin_cached)
# ----------------------------------------------------------------------------
def precompute_rope_tables(seq_len, dim, inv_freq, dtype=jnp.float32):
    """Returns (cos, sin_signed), each (seq_len, dim).  sin_signed = [-sin | sin]
    so the rotate_half sign flip is pre-folded.  Compute once and reuse."""
    half = dim // 2
    pos = jnp.arange(seq_len, dtype=jnp.float32)
    freqs = pos[:, None] * inv_freq.astype(jnp.float32)[None, :]   # (L, half)
    cos_h = jnp.cos(freqs)
    sin_h = jnp.sin(freqs)
    cos = jnp.concatenate([cos_h, cos_h], axis=-1)                 # (L, D)
    sin_signed = jnp.concatenate([-sin_h, sin_h], axis=-1)         # (L, D)
    return cos.astype(dtype), sin_signed.astype(dtype)


# ----------------------------------------------------------------------------
# Wrapper
# ----------------------------------------------------------------------------
def rope_pallas(x, inv_freq, *, tables=None, table_dtype=None):
    """Apply rotary positional embedding to x of shape (B, L, D)."""
    B, L, D = x.shape
    if D % 2 != 0:
        raise ValueError(f"Dimension must be even for RoPE, got {D}")
    half = D // 2
    tdtype = jnp.dtype(table_dtype) if table_dtype is not None else x.dtype

    # Lane packing: fold k consecutive positions into the last axis so the
    # stored last dim is a multiple of 128 (unmasked vector stores).
    if D % 128 == 0:
        k = 1
    elif 128 % D == 0 and L % (128 // D) == 0:
        k = 128 // D
    else:
        k = 1  # TODO(synk): odd D < 128 not dividing 128 keeps masked stores.
    Lp, W = L // k, k * D

    if tables is None:
        cos, sin_signed = precompute_rope_tables(L, D, inv_freq, dtype=tdtype)
    else:
        cos, sin_signed = tables
        cos = cos.astype(tdtype)
        sin_signed = sin_signed.astype(tdtype)

    # Free (contiguous) reshapes: (B, L, D) -> (B, L/k, k*D); tables likewise.
    xp = x.reshape(B, Lp, W)
    cos = cos.reshape(Lp, W)
    sin_signed = sin_signed.reshape(Lp, W)

    bblk, tl = _choose_tiles(B, Lp, W, x.dtype.itemsize, jnp.dtype(tdtype).itemsize)
    # seq outer, batch inner: table blocks stay resident across the batch loop.
    grid = (pl.cdiv(Lp, tl), pl.cdiv(B, bblk))

    kernel = _make_rope_kernel(half, D, packed=(k > 1))

    out = pl.pallas_call(
        kernel,
        out_shape=jax.ShapeDtypeStruct((B, Lp, W), x.dtype),
        grid_spec=pltpu.PrefetchScalarGridSpec(
            num_scalar_prefetch=0,
            grid=grid,
            in_specs=[
                pl.BlockSpec((bblk, tl, W), lambda l, b: (b, l, 0)),   # x
                pl.BlockSpec((tl, W), lambda l, b: (l, 0)),            # cos
                pl.BlockSpec((tl, W), lambda l, b: (l, 0)),            # sin (sign-folded)
            ],
            out_specs=pl.BlockSpec((bblk, tl, W), lambda l, b: (b, l, 0)),
        ),
        compiler_params=pltpu.CompilerParams(
            dimension_semantics=("parallel", "parallel")),
    )(xp, cos, sin_signed)
    return out.reshape(B, L, D)


# ----------------------------------------------------------------------------
# Pure-JAX reference (mirrors the PyTorch forward) for validation
# ----------------------------------------------------------------------------
def rope_ref(x, inv_freq):
    B, L, D = x.shape
    half = D // 2
    pos = jnp.arange(L, dtype=jnp.float32)
    freqs = pos[:, None] * inv_freq[None, :]
    emb = jnp.concatenate([freqs, freqs], axis=-1)
    cos = jnp.cos(emb)[None]
    sin = jnp.sin(emb)[None]
    x1 = x[..., :half]
    x2 = x[..., half:]
    rot = jnp.concatenate([-x2, x1], axis=-1)
    return x * cos + rot * sin


if __name__ == "__main__":
    base = 10000

    # Case 1: head_dim 64 (packed k=2 -> lane-dense 128-wide rows), cached tables.
    B, L, D = 2, 16, 64
    half = D // 2
    key = jax.random.PRNGKey(0)
    x = jax.random.normal(key, (B, L, D), jnp.float32)
    inv_freq = 1.0 / (base ** (jnp.arange(half, dtype=jnp.float32) / half))
    tables = precompute_rope_tables(L, D, inv_freq)   # hoisted, reusable across calls
    out = rope_pallas(x, inv_freq, tables=tables)
    jax.block_until_ready(out)
    ref = rope_ref(x, inv_freq)
    assert out.shape == (B, L, D)
    assert jnp.allclose(out, ref, atol=1e-5, rtol=1e-5), "case 1 mismatch vs reference"

    # Case 2: dim 32 (packed k=4), batch-blocked path, tables built internally.
    B2, L2, D2 = 3, 24, 32
    half2 = D2 // 2
    x2 = jax.random.normal(jax.random.PRNGKey(0), (B2, L2, D2), jnp.float32)
    inv_freq2 = 1.0 / (base ** (jnp.arange(half2, dtype=jnp.float32) / half2))
    out2 = rope_pallas(x2, inv_freq2)
    jax.block_until_ready(out2)
    ref2 = rope_ref(x2, inv_freq2)
    assert out2.shape == (B2, L2, D2)
    assert jnp.allclose(out2, ref2, atol=1e-5, rtol=1e-5), "case 2 mismatch vs reference"

    print("KERNEL_OK")
</pallas_src>

<mosaic_0001>
module attributes {stable_mosaic.version = 11 : i64} {
  func.func @rope_kernel(%arg0: i32, %arg1: i32, %arg2: memref<2x8x128xf32, #tpu.memory_space<vmem>>, %arg3: memref<8x128xf32, #tpu.memory_space<vmem>>, %arg4: memref<8x128xf32, #tpu.memory_space<vmem>>, %arg5: memref<2x8x128xf32, #tpu.memory_space<vmem>>) attributes {dimension_semantics = [#tpu.dimension_semantics<parallel>, #tpu.dimension_semantics<parallel>], iteration_bounds = array<i64: 1, 1>, scalar_prefetch = 0 : i64, scratch_operands = 0 : i64, tpu.core_type = #tpu.core_type<tc>, window_params = [{transform_indices = @transform_0, window_bounds = array<i64: 2, 8, 128>}, {transform_indices = @transform_1, window_bounds = array<i64: 8, 128>}, {transform_indices = @transform_2, window_bounds = array<i64: 8, 128>}, {transform_indices = @transform_3, window_bounds = array<i64: 2, 8, 128>}]} {
    %c0 = arith.constant 0 : index
    %c0_0 = arith.constant 0 : index
    %c0_1 = arith.constant 0 : index
    %0 = vector.load %arg2[%c0, %c0_0, %c0_1] : memref<2x8x128xf32, #tpu.memory_space<vmem>>, vector<2x8x128xf32>
    %c96_i32 = arith.constant 96 : i32
    %1 = tpu.dynamic_rotate %0 by %c96_i32 dim 2 : vector<2x8x128xf32>, i32 -> vector<2x8x128xf32>
    %c32_i32 = arith.constant 32 : i32
    %2 = tpu.dynamic_rotate %0 by %c32_i32 dim 2 : vector<2x8x128xf32>, i32 -> vector<2x8x128xf32>
    %3 = tpu.iota {dimensions = array<i32: 2>} : vector<2x8x128xi32>
    %c64_i32 = arith.constant 64 : i32
    %c0_i32 = arith.constant 0 : i32
    %4 = arith.cmpi eq, %c64_i32, %c0_i32 : i32
    %c1_i32 = arith.constant 1 : i32
    %5 = arith.select %4, %c1_i32, %c64_i32 : i32
    %6 = vector.broadcast %5 : i32 to vector<2x8x128xi32>
    %7 = arith.remsi %3, %6 : vector<2x8x128xi32>
    %c0_i32_2 = arith.constant 0 : i32
    %8 = vector.broadcast %c0_i32_2 : i32 to vector<2x8x128xi32>
    %9 = arith.cmpi ne, %7, %8 : vector<2x8x128xi32>
    %c0_i32_3 = arith.constant 0 : i32
    %10 = vector.broadcast %c0_i32_3 : i32 to vector<2x8x128xi32>
    %11 = arith.cmpi slt, %7, %10 : vector<2x8x128xi32>
    %c0_i32_4 = arith.constant 0 : i32
    %12 = arith.cmpi slt, %5, %c0_i32_4 : i32
    %13 = vector.broadcast %12 : i1 to vector<2x8x128xi1>
    %14 = vector.broadcast %13 : vector<2x8x128xi1> to vector<2x8x128xi1>
    %15 = arith.xori %11, %14 : vector<2x8x128xi1>
    %16 = arith.andi %15, %9 : vector<2x8x128xi1>
    %17 = vector.broadcast %5 : i32 to vector<2x8x128xi32>
    %18 = arith.addi %7, %17 : vector<2x8x128xi32>
    %19 = arith.select %16, %18, %7 : vector<2x8x128xi1>, vector<2x8x128xi32>
    %c32_i32_5 = arith.constant 32 : i32
    %20 = vector.broadcast %c32_i32_5 : i32 to vector<2x8x128xi32>
    %21 = arith.cmpi slt, %19, %20 : vector<2x8x128xi32>
    %22 = arith.select %21, %1, %2 : vector<2x8x128xi1>, vector<2x8x128xf32>
    %c0_6 = arith.constant 0 : index
    %c0_7 = arith.constant 0 : index
    %23 = vector.load %arg3[%c0_6, %c0_7] : memref<8x128xf32, #tpu.memory_space<vmem>>, vector<8x128xf32>
    %24 = vector.shape_cast %23 : vector<8x128xf32> to vector<1x8x128xf32>
    %c0_8 = arith.constant 0 : index
    %c0_9 = arith.constant 0 : index
    %25 = vector.load %arg4[%c0_8, %c0_9] : memref<8x128xf32, #tpu.memory_space<vmem>>, vector<8x128xf32>
    %26 = vector.shape_cast %25 : vector<8x128xf32> to vector<1x8x128xf32>
    %27 = vector.broadcast %24 : vector<1x8x128xf32> to vector<2x8x128xf32>
    %28 = arith.mulf %0, %27 : vector<2x8x128xf32>
    %29 = vector.broadcast %26 : vector<1x8x128xf32> to vector<2x8x128xf32>
    %30 = arith.mulf %22, %29 : vector<2x8x128xf32>
    %31 = arith.addf %28, %30 : vector<2x8x128xf32>
    %c0_10 = arith.constant 0 : index
    %c0_11 = arith.constant 0 : index
    %c0_12 = arith.constant 0 : index
    %32 = vector.load %arg5[%c0_10, %c0_11, %c0_12] : memref<2x8x128xf32, #tpu.memory_space<vmem>>, vector<2x8x128xf32>
    tpu.vector_store %arg5[%c0_10, %c0_11, %c0_12], %31 {strides = array<i32>} : memref<2x8x128xf32, #tpu.memory_space<vmem>>, vector<2x8x128xf32>,
    return
  }
  func.func @transform_0(%arg0: i32, %arg1: i32) -> (i32, i32, i32) {
    %c0_i32 = arith.constant 0 : i32
    %c0_i32_0 = arith.constant 0 : i32
    return %arg1, %arg0, %c0_i32 : i32, i32, i32
  }
  func.func @transform_1(%arg0: i32, %arg1: i32) -> (i32, i32) {
    %c0_i32 = arith.constant 0 : i32
    %c0_i32_0 = arith.constant 0 : i32
    return %arg0, %c0_i32 : i32, i32
  }
  func.func @transform_2(%arg0: i32, %arg1: i32) -> (i32, i32) {
    %c0_i32 = arith.constant 0 : i32
    %c0_i32_0 = arith.constant 0 : i32
    return %arg0, %c0_i32 : i32, i32
  }
  func.func @transform_3(%arg0: i32, %arg1: i32) -> (i32, i32, i32) {
    %c0_i32 = arith.constant 0 : i32
    %c0_i32_0 = arith.constant 0 : i32
    return %arg1, %arg0, %c0_i32 : i32, i32, i32
  }
}

</mosaic_0001>

<llo_original>
// kernel: tpu_custom_call.1
$region0: #{tpu_custom_call.1}
  #allocation0 [shape = 'u32[]', space=smem, size = 0x4, offset = 0x4, fixed_abs, tag = 'smem constant byte address 0x4 - core index']
  #allocation1 [shape = 'u32[144,128]{1,0:T(1,128)}', space=vmem, size = 0x12000, scoped, tag = 'internal scratch']
  %s0 = inlined_call_operand.hbm [shape: f32[2,8,128], index: 0, kind: input, shape index: {}]
  %s1 = inlined_call_operand.hbm [shape: f32[8,128], index: 1, kind: input, shape index: {}]
  %s2 = inlined_call_operand.hbm [shape: f32[8,128], index: 2, kind: input, shape index: {}]
  %s3 = inlined_call_operand.hbm [shape: f32[2,8,128], index: 3, kind: output, shape index: {}]
  %s4 = sld [smem:[#allocation0]]
  $region34: #{tpu_custom_call.1} parent=0
    _
  %s6 = ssub.s32 1, %s4
  %s7 = scalar_select 0, %s6, %s4
  $region1: #{tpu_custom_call.1} parent=0
    #allocation2 [shape = 'u8[8192]{0}', space=vmem, size = 0x2000, scoped, tag = 'input window, operand 0, single buffered']
    #allocation3 [shape = 's32[1]{0}', space=sflag, size = 0x4, scoped, tag = 'scoped memory for tpu_custom_call.1']
    #allocation4 [shape = 's32[1]{0}', space=sflag, size = 0x4, scoped, tag = 'scoped memory for tpu_custom_call.1']
    #allocation5 [shape = 'u8[4096]{0}', space=vmem, size = 0x1000, scoped, tag = 'input window, operand 1, single buffered']
    #allocation6 [shape = 's32[1]{0}', space=sflag, size = 0x4, scoped, tag = 'scoped memory for tpu_custom_call.1']
    #allocation7 [shape = 'u8[4096]{0}', space=vmem, size = 0x1000, scoped, tag = 'input window, operand 2, single buffered']
    #allocation8 [shape = 'u8[8192]{0}', space=vmem, size = 0x2000, scoped, tag = 'output window, operand 0, single buffered']
    %8 = vsyncpa [#allocation3], 0
    %9 = vsyncpa [#allocation6], 0
    %10 = vsyncpa [#allocation4], 0
    // Predicated region
    $region2: #{tpu_custom_call.1} parent=1 // pred_check
      _
    $region3: #{tpu_custom_call.1} parent=1 // pred_check_branch
      %12 = sbr.rel (0) target = $region5
    $region4: #{tpu_custom_call.1} parent=1 // pred_region
      %s14 = ssub.s32 256, 256
      %15 = vsyncadd [#allocation3], %s14
      %s16 = sshll.u32 [#allocation2], 4
      %s17 = int_to_ptr.vmem [resolvable:$true] %s16
      %22 = dma.hbm_to_vmem [thread:$0]  %s0, 256, %s17, [#allocation3], 128, 128, 8
    $region5: #{tpu_custom_call.1} parent=1 // pred_fallthru
      _
    // Predicated region
    $region6: #{tpu_custom_call.1} parent=1 // pred_check
      _
    $region7: #{tpu_custom_call.1} parent=1 // pred_check_branch
      %24 = sbr.rel (0) target = $region9
    $region8: #{tpu_custom_call.1} parent=1 // pred_region
      %s26 = ssub.s32 128, 128
      %27 = vsyncadd [#allocation6], %s26
      %s29 = sshll.u32 [#allocation5], 4
      %s30 = int_to_ptr.vmem [resolvable:$true] %s29
      %32 = dma.hbm_to_vmem [thread:$0]  %s1, 128, %s30, [#allocation6]
    $region9: #{tpu_custom_call.1} parent=1 // pred_fallthru
      _
    // Predicated region
    $region10: #{tpu_custom_call.1} parent=1 // pred_check
      _
    $region11: #{tpu_custom_call.1} parent=1 // pred_check_branch
      %34 = sbr.rel (0) target = $region13
    $region12: #{tpu_custom_call.1} parent=1 // pred_region
      %s36 = ssub.s32 128, 128
      %37 = vsyncadd [#allocation6], %s36
      %s39 = sshll.u32 [#allocation7], 4
      %s40 = int_to_ptr.vmem [resolvable:$true] %s39
      %42 = dma.hbm_to_vmem [thread:$0]  %s2, 128, %s40, [#allocation6]
    $region13: #{tpu_custom_call.1} parent=1 // pred_fallthru
      _
    // Predicated region
    $region14: #{tpu_custom_call.1} parent=1 // pred_check
      _
    $region15: #{tpu_custom_call.1} parent=1 // pred_check_branch
      %44 = sbr.rel (0) target = $region17
    $region16: #{tpu_custom_call.1} parent=1 // pred_region
      %45 = dma.done [#allocation3], 256
    $region17: #{tpu_custom_call.1} parent=1 // pred_fallthru
      _
    // Predicated region
    $region18: #{tpu_custom_call.1} parent=1 // pred_check
      _
    $region19: #{tpu_custom_call.1} parent=1 // pred_check_branch
      %47 = sbr.rel (0) target = $region21
    $region20: #{tpu_custom_call.1} parent=1 // pred_region
      %48 = dma.done [#allocation6], 128
    $region21: #{tpu_custom_call.1} parent=1 // pred_fallthru
      _
    // Predicated region
    $region22: #{tpu_custom_call.1} parent=1 // pred_check
      _
    $region23: #{tpu_custom_call.1} parent=1 // pred_check_branch
      %50 = sbr.rel (0) target = $region25
    $region24: #{tpu_custom_call.1} parent=1 // pred_region
      %51 = dma.done [#allocation6], 128
    $region25: #{tpu_custom_call.1} parent=1 // pred_fallthru
      _
    %v52 = vld [vmem:[#allocation2] sm:$0xff]
    %v53 = vld [vmem:[#allocation2 + $0x8] sm:$0xff]
    %54 = vrot.lane.b32.xlu0 %v52, 96
    %v55 = vpop.permute.xlu0 %54
    %56 = vrot.lane.b32.xlu0 %v53, 96
    %v57 = vpop.permute.xlu0 %56
    %58 = vrot.lane.b32.xlu0 %v52, 32
    %v59 = vpop.permute.xlu0 %58
    %60 = vrot.lane.b32.xlu0 %v53, 32
    %v61 = vpop.permute.xlu0 %60
    %v62 = vlaneseq
    %v63 = vand.u32 %v62, 127
    %vm64 = vcmp.lt.s32.totalorder %v63, 0
    %v65 = vsub.s32 0, %v63
    %v66 = vsel %vm64, %v65, %v63
    %v67 = vshrl.u32 %v66, 6
    %v68 = vand.u32 %v66, 63
    %v69 = vsub.s32 0, %v68
    %v70 = vsel %vm64, %v69, %v68
    %vm71 = vcmp.ne.s32.totalorder %v70, 0
    %vm72 = vcmp.lt.s32.totalorder %v70, 0
    %vm73 = vmand %vm72, %vm71
    %v74 = vadd.s32 %v70, 64
    %v75 = vsel %vm73, %v74, %v70
    %vm76 = vcmp.lt.s32.totalorder %v75, 32
    %v77 = vsel %vm76, %v55, %v59
    %v78 = vsel %vm76, %v57, %v61
    %v79 = vld [vmem:[#allocation5] sm:$0xff]
    %v80 = vld [vmem:[#allocation7] sm:$0xff]
    %v81 = vmul.f32 %v52, %v79
    %v82 = vmul.f32 %v53, %v79
    %v83 = vmul.f32 %v77, %v80
    %v84 = vmul.f32 %v78, %v80
    %v85 = vadd.f32 %v81, %v83
    %v86 = vadd.f32 %v82, %v84
    %87 = vst [vmem:[#allocation8] sm:$0xff] %v85
    %88 = vst [vmem:[#allocation8 + $0x8] sm:$0xff] %v86
    // Predicated region
    $region26: #{tpu_custom_call.1} parent=1 // pred_check
      _
    $region27: #{tpu_custom_call.1} parent=1 // pred_check_branch
      %90 = sbr.rel (0) target = $region29
    $region28: #{tpu_custom_call.1} parent=1 // pred_region
      %s92 = ssub.s32 256, 256
      %93 = vsyncadd [#allocation4], %s92
      %s94 = sshll.u32 [#allocation8], 4
      %s95 = int_to_ptr.vmem [resolvable:$true] %s94
      %100 = dma.vmem_to_hbm [thread:$0]  %s95, 256, %s3, [#allocation4], 128, 128, 8
    $region29: #{tpu_custom_call.1} parent=1 // pred_fallthru
      _
    // Predicated region
    $region30: #{tpu_custom_call.1} parent=1 // pred_check
      _
    $region31: #{tpu_custom_call.1} parent=1 // pred_check_branch
      %102 = sbr.rel (0) target = $region33
    $region32: #{tpu_custom_call.1} parent=1 // pred_region
      %103 = dma.done [#allocation4], 256
    $region33: #{tpu_custom_call.1} parent=1 // pred_fallthru
      _
    %104 = vsyncpa [#allocation3], 1
    %105 = vsyncpa [#allocation6], 1
    %106 = vsyncpa [#allocation4], 1

</llo_original>
